<compile_context>
chip_gen: v7x
topology: tpu7x:2x2x1
jax: 0.10.0
libtpu: 0.0.40
codegen_flags: <defaults>
</compile_context>

<pallas_src>
import jax
import jax.numpy as jnp
from jax.experimental import pallas as pl
from jax.experimental.pallas import tpu as pltpu


def _round_up(n, m):
    return ((n + m - 1) // m) * m


def _sublane_mult(dtype):
    # f32 -> 8, bf16 -> 16, int8/bool -> 32 rows per sublane tile.
    return max(8, 32 // max(1, jnp.dtype(dtype).itemsize))


def _pick_inner_rows(block_b, c, mult):
    # Keep per-chunk f32 intermediates around <=16 KiB so the fused elementwise
    # chain stays in vregs between the load and the (8, C) fold.
    rows = max(mult, (16384 // max(1, 4 * c)) // mult * mult)
    rows = min(rows, block_b)
    while block_b % rows:
        rows -= mult
    return max(rows, mult)


def _make_focal_kernel(b_valid, block_b, c, inner_rows, needs_mask,
                       binary_targets, gamma):
    n_inner = block_b // inner_rows
    groups = inner_rows // 8
    gamma = float(gamma)

    def _chunk_loss(xs, ts):
        x = xs.astype(jnp.float32)
        t = ts.astype(jnp.float32)
        z = -x * (t * 2.0 - 1.0)
        e = jnp.exp(-jnp.abs(z))          # EUP
        log1pe = jnp.log1p(e)             # EUP
        if binary_targets:
            # For t in {0,1}: BCE(x, t) == softplus(z) and |z| == |x|,
            # so the exp(-|x|) above is reused (saves one EUP op/element).
            bce = jnp.maximum(z, 0.0) + log1pe
        else:
            # Stable BCE-with-logits, valid for soft targets too.
            bce = jnp.maximum(x, 0.0) - x * t + jnp.log1p(jnp.exp(-jnp.abs(x)))
        if gamma == 2.0:
            # exp(2*logsigmoid(z)) == sigmoid(z)**2.  Stable sigmoid with an
            # approximate reciprocal + one Newton-Raphson step (VALU).
            d = 1.0 + e
            r = pl.reciprocal(d, approx=True)
            r = r * (2.0 - d * r)
            sig = jnp.where(z >= 0.0, 1.0, e) * r
            w = sig * sig
        else:
            # General gamma: logsigmoid(z) = min(z, 0) - log1p(exp(-|z|)).
            w = jnp.exp(gamma * (jnp.minimum(z, 0.0) - log1pe))
        return w * bce

    def _fold(v):
        # (inner_rows, C) -> (8, C).  Splitting rows into groups of 8 is the
        # native sublane tiling (layout no-op); the reduce is pure VPU adds.
        if groups == 1:
            return v
        return v.reshape(groups, 8, c).sum(axis=0)

    def kernel(x_ref, t_ref, o_ref):
        i = pl.program_id(0)

        def block_partial(masked):
            def body(k, acc):
                start = pl.multiple_of(k * inner_rows, inner_rows)
                loss = _chunk_loss(x_ref[pl.ds(start, inner_rows), :],
                                   t_ref[pl.ds(start, inner_rows), :])
                if masked:
                    rows = jax.lax.broadcasted_iota(
                        jnp.int32, (inner_rows, 1), 0)
                    valid = (i * block_b + start + rows) < b_valid
                    loss = jnp.where(valid, loss, 0.0)
                return acc + _fold(loss)

            init = jnp.zeros((8, c), jnp.float32)
            return jax.lax.fori_loop(0, n_inner, body, init,
                                     unroll=min(n_inner, 4))

        if needs_mask:
            last = pl.num_programs(0) - 1

            @pl.when(i == last)
            def _():
                o_ref[...] = block_partial(True)

            @pl.when(i != last)
            def _():
                o_ref[...] = block_partial(False)
        else:
            o_ref[...] = block_partial(False)

    return kernel


def focal_loss(x, t, *, gamma=2.0, block_b=None, binary_targets=False):
    if x.shape != t.shape:
        raise ValueError(
            "Target size ({}) must be the same as input size ({})".format(
                t.shape, x.shape))
    assert x.ndim == 2, "expected [B, C] inputs"
    b, c = x.shape

    mult = max(_sublane_mult(x.dtype), _sublane_mult(t.dtype))
    b_pad = _round_up(b, mult)
    if b_pad != b:
        # Pad to a sublane-aligned row count; padded rows are masked in-kernel.
        x = jnp.pad(x, ((0, b_pad - b), (0, 0)))
        t = jnp.pad(t, ((0, b_pad - b), (0, 0)))

    ix = jnp.dtype(x.dtype).itemsize
    it = jnp.dtype(t.dtype).itemsize

    # Generation-aware VMEM budget (v5e/v6e: 128 MiB, v7x: 64 MiB physical).
    try:
        vmem_cap = int(getattr(pltpu.get_tpu_info(), "vmem_capacity_bytes",
                               64 * 1024 * 1024))
    except Exception:
        vmem_cap = 64 * 1024 * 1024
    pipeline_budget = min(vmem_cap // 2, 32 * 1024 * 1024)

    if block_b is None:
        target_rows = (4 * 1024 * 1024) // max(1, c * ix)     # ~4 MiB logits
        budget_rows = pipeline_budget // max(1, 2 * c * (ix + it))
        block_b = min(target_rows, budget_rows, 8192)
    block_b = max(mult, (int(block_b) // mult) * mult)
    block_b = min(block_b, b_pad)

    grid = pl.cdiv(b_pad, block_b)
    needs_mask = (b % block_b) != 0
    inner_rows = _pick_inner_rows(block_b, c, mult)

    footprint = 2 * block_b * c * (ix + it) + 2 * 8 * c * 4
    vmem_limit = int(min(max(32 * 1024 * 1024, footprint + (8 << 20)),
                         max(vmem_cap - (16 << 20), 32 * 1024 * 1024)))

    n_trans = (2 if binary_targets else 3) + (0 if float(gamma) == 2.0 else 1)
    cost = pl.CostEstimate(
        flops=18 * b * c,
        transcendentals=n_trans * b * c,
        bytes_accessed=(ix + it) * b_pad * c + grid * 8 * c * 4,
    )

    partials = pl.pallas_call(
        _make_focal_kernel(b, block_b, c, inner_rows, needs_mask,
                           binary_targets, gamma),
        out_shape=jax.ShapeDtypeStruct((grid, 8, c), jnp.float32),
        grid=(grid,),
        in_specs=[
            pl.BlockSpec((block_b, c), lambda i: (i, 0)),
            pl.BlockSpec((block_b, c), lambda i: (i, 0)),
        ],
        out_specs=pl.BlockSpec((None, 8, c), lambda i: (i, 0, 0)),
        compiler_params=pltpu.CompilerParams(
            dimension_semantics=("parallel",),
            vmem_limit_bytes=vmem_limit,
        ),
        cost_estimate=cost,
    )(x, t)

    # loss.sum(dim=1).mean() over [B, C] == sum(all elements) / B.
    return jnp.sum(partials) / jnp.float32(b)


def _focal_loss_ref(x, t, gamma=2.0):
    # Pure-JAX reference identical to the PyTorch forward.
    max_val = jnp.maximum(-x, 0.0)
    loss = x - x * t + max_val + jnp.log(jnp.exp(-max_val) + jnp.exp(-x - max_val))
    invprobs = jax.nn.log_sigmoid(-x * (t * 2.0 - 1.0))
    loss = jnp.exp(invprobs * gamma) * loss
    return loss.sum(axis=1).mean()


if __name__ == "__main__":
    key = jax.random.PRNGKey(0)

    def run_case(b, c, *, block_b=None, t_dtype=jnp.float32,
                 binary_targets=False, gamma=2.0):
        k1, k2 = jax.random.split(jax.random.fold_in(key, b * 1009 + c))
        x = jax.random.normal(k1, (b, c), dtype=jnp.float32) * 2.0
        t_bits = jax.random.bernoulli(k2, p=0.3, shape=(b, c))
        t = t_bits.astype(t_dtype)
        out = jax.block_until_ready(
            focal_loss(x, t, gamma=gamma, block_b=block_b,
                       binary_targets=binary_targets))
        ref = jax.block_until_ready(
            _focal_loss_ref(x, t_bits.astype(jnp.float32), gamma=gamma))
        assert jnp.allclose(out, ref, rtol=1e-5, atol=1e-5), \
            (b, c, float(out), float(ref))

    run_case(8, 128)                                    # single tile, exact fit
    run_case(12, 128)                                   # ragged batch -> pad + tail mask
    run_case(40, 128, block_b=16)                       # multi-block parallel grid + mask
    run_case(32, 128, t_dtype=jnp.bfloat16,
             binary_targets=True)                       # narrow target stream, 2-EUP path
    run_case(16, 8)                                     # tiny channel count
    run_case(16, 128, gamma=3.0)                        # general-gamma fallback
    print("KERNEL_OK")
</pallas_src>

<mosaic_0001>
module attributes {stable_mosaic.version = 11 : i64} {
  func.func @kernel(%arg0: i32, %arg1: memref<8x128xf32, #tpu.memory_space<vmem>>, %arg2: memref<8x128xf32, #tpu.memory_space<vmem>>, %arg3: memref<1x8x128xf32, #tpu.memory_space<vmem>>) attributes {dimension_semantics = [#tpu.dimension_semantics<parallel>], iteration_bounds = array<i64: 1>, scalar_prefetch = 0 : i64, scratch_operands = 0 : i64, tpu.core_type = #tpu.core_type<tc>, window_params = [{transform_indices = @transform_0, window_bounds = array<i64: 8, 128>}, {transform_indices = @transform_1, window_bounds = array<i64: 8, 128>}, {transform_indices = @transform_2, window_bounds = array<i64: 1, 8, 128>}]} {
    %cst = arith.constant 0.000000e+00 : f32
    %0 = vector.broadcast %cst : f32 to vector<8x128xf32>
    %c0_i32 = arith.constant 0 : i32
    %c8_i32 = arith.constant 8 : i32
    %1 = arith.muli %c0_i32, %c8_i32 : i32
    %2 = tpu.assume_multiple %1, 8 : i32
    %3 = arith.index_cast %2 : i32 to index
    %c0 = arith.constant 0 : index
    %4 = vector.load %arg1[%3, %c0] : memref<8x128xf32, #tpu.memory_space<vmem>>, vector<8x128xf32>
    %5 = arith.index_cast %2 : i32 to index
    %c0_0 = arith.constant 0 : index
    %6 = vector.load %arg2[%5, %c0_0] : memref<8x128xf32, #tpu.memory_space<vmem>>, vector<8x128xf32>
    %cst_1 = arith.constant 0.000000e+00 : f32
    %7 = vector.broadcast %cst_1 : f32 to vector<8x128xf32>
    %8 = arith.subf %7, %4 : vector<8x128xf32>
    %cst_2 = arith.constant 2.000000e+00 : f32
    %9 = vector.broadcast %cst_2 : f32 to vector<8x128xf32>
    %10 = arith.mulf %6, %9 : vector<8x128xf32>
    %cst_3 = arith.constant 1.000000e+00 : f32
    %11 = vector.broadcast %cst_3 : f32 to vector<8x128xf32>
    %12 = arith.subf %10, %11 : vector<8x128xf32>
    %13 = arith.mulf %8, %12 : vector<8x128xf32>
    %14 = math.absf %13 : vector<8x128xf32>
    %cst_4 = arith.constant 0.000000e+00 : f32
    %15 = vector.broadcast %cst_4 : f32 to vector<8x128xf32>
    %16 = arith.subf %15, %14 : vector<8x128xf32>
    %17 = math.exp %16 : vector<8x128xf32>
    %cst_5 = arith.constant 0.000000e+00 : f32
    %18 = vector.broadcast %cst_5 : f32 to vector<8x128xf32>
    %19 = arith.maximumf %4, %18 : vector<8x128xf32>
    %20 = arith.mulf %4, %6 : vector<8x128xf32>
    %21 = arith.subf %19, %20 : vector<8x128xf32>
    %22 = math.absf %4 : vector<8x128xf32>
    %cst_6 = arith.constant 0.000000e+00 : f32
    %23 = vector.broadcast %cst_6 : f32 to vector<8x128xf32>
    %24 = arith.subf %23, %22 : vector<8x128xf32>
    %25 = math.exp %24 : vector<8x128xf32>
    %26 = math.log1p %25 : vector<8x128xf32>
    %27 = arith.addf %21, %26 : vector<8x128xf32>
    %cst_7 = arith.constant 1.000000e+00 : f32
    %28 = vector.broadcast %cst_7 : f32 to vector<8x128xf32>
    %29 = arith.addf %28, %17 : vector<8x128xf32>
    %30 = tpu.reciprocal %29 {approx = true} : vector<8x128xf32> -> vector<8x128xf32>
    %31 = arith.mulf %29, %30 : vector<8x128xf32>
    %cst_8 = arith.constant 2.000000e+00 : f32
    %32 = vector.broadcast %cst_8 : f32 to vector<8x128xf32>
    %33 = arith.subf %32, %31 : vector<8x128xf32>
    %34 = arith.mulf %30, %33 : vector<8x128xf32>
    %cst_9 = arith.constant 0.000000e+00 : f32
    %35 = vector.broadcast %cst_9 : f32 to vector<8x128xf32>
    %36 = arith.cmpf oge, %13, %35 : vector<8x128xf32>
    %cst_10 = arith.constant 1.000000e+00 : f32
    %37 = vector.broadcast %cst_10 : f32 to vector<8x128xf32>
    %38 = arith.select %36, %37, %17 : vector<8x128xi1>, vector<8x128xf32>
    %39 = arith.mulf %38, %34 : vector<8x128xf32>
    %40 = arith.mulf %39, %39 : vector<8x128xf32>
    %41 = arith.mulf %40, %27 : vector<8x128xf32>
    %42 = arith.addf %0, %41 : vector<8x128xf32>
    %c1_i32 = arith.constant 1 : i32
    %c0_11 = arith.constant 0 : index
    %c0_12 = arith.constant 0 : index
    %c0_13 = arith.constant 0 : index
    %43 = vector.load %arg3[%c0_11, %c0_12, %c0_13] : memref<1x8x128xf32, #tpu.memory_space<vmem>>, vector<1x8x128xf32>
    %44 = vector.shape_cast %43 : vector<1x8x128xf32> to vector<8x128xf32>
    %45 = vector.shape_cast %42 : vector<8x128xf32> to vector<1x8x128xf32>
    tpu.vector_store %arg3[%c0_11, %c0_12, %c0_13], %45 {strides = array<i32>} : memref<1x8x128xf32, #tpu.memory_space<vmem>>, vector<1x8x128xf32>,
    return
  }
  func.func @transform_0(%arg0: i32) -> (i32, i32) {
    %c0_i32 = arith.constant 0 : i32
    %c0_i32_0 = arith.constant 0 : i32
    return %arg0, %c0_i32 : i32, i32
  }
  func.func @transform_1(%arg0: i32) -> (i32, i32) {
    %c0_i32 = arith.constant 0 : i32
    %c0_i32_0 = arith.constant 0 : i32
    return %arg0, %c0_i32 : i32, i32
  }
  func.func @transform_2(%arg0: i32) -> (i32, i32, i32) {
    %c0_i32 = arith.constant 0 : i32
    %c0_i32_0 = arith.constant 0 : i32
    %c0_i32_1 = arith.constant 0 : i32
    return %arg0, %c0_i32, %c0_i32_0 : i32, i32, i32
  }
}

</mosaic_0001>

<llo_original>
// kernel: tpu_custom_call.1
$region0: #{tpu_custom_call.1}
  #allocation0 [shape = 'u32[]', space=smem, size = 0x4, offset = 0x4, fixed_abs, tag = 'smem constant byte address 0x4 - core index']
  #allocation1 [shape = 'u32[144,128]{1,0:T(1,128)}', space=vmem, size = 0x12000, scoped, tag = 'internal scratch']
  %s0 = inlined_call_operand.hbm [shape: f32[8,128], index: 0, kind: input, shape index: {}]
  %s1 = inlined_call_operand.hbm [shape: f32[8,128], index: 1, kind: input, shape index: {}]
  %s2 = inlined_call_operand.hbm [shape: f32[1,8,128], index: 2, kind: output, shape index: {}]
  %s3 = sld [smem:[#allocation0]]
  $region26: #{tpu_custom_call.1} parent=0
    _
  %s5 = ssub.s32 1, %s3
  %s6 = scalar_select 0, %s5, %s3
  $region1: #{tpu_custom_call.1} parent=0
    #allocation2 [shape = 'u8[4096]{0}', space=vmem, size = 0x1000, scoped, tag = 'input window, operand 0, single buffered']
    #allocation3 [shape = 's32[1]{0}', space=sflag, size = 0x4, scoped, tag = 'scoped memory for tpu_custom_call.1']
    #allocation4 [shape = 's32[1]{0}', space=sflag, size = 0x4, scoped, tag = 'scoped memory for tpu_custom_call.1']
    #allocation5 [shape = 'u8[4096]{0}', space=vmem, size = 0x1000, scoped, tag = 'input window, operand 1, single buffered']
    #allocation6 [shape = 's32[1]{0}', space=sflag, size = 0x4, scoped, tag = 'scoped memory for tpu_custom_call.1']
    #allocation7 [shape = 'u8[4096]{0}', space=vmem, size = 0x1000, scoped, tag = 'output window, operand 0, single buffered']
    %7 = vsyncpa [#allocation3], 0
    %8 = vsyncpa [#allocation6], 0
    %9 = vsyncpa [#allocation4], 0
    // Predicated region
    $region2: #{tpu_custom_call.1} parent=1 // pred_check
      _
    $region3: #{tpu_custom_call.1} parent=1 // pred_check_branch
      %11 = sbr.rel (0) target = $region5
    $region4: #{tpu_custom_call.1} parent=1 // pred_region
      %s13 = ssub.s32 128, 128
      %14 = vsyncadd [#allocation3], %s13
      %s16 = sshll.u32 [#allocation2], 4
      %s17 = int_to_ptr.vmem [resolvable:$true] %s16
      %19 = dma.hbm_to_vmem [thread:$0]  %s0, 128, %s17, [#allocation3]
    $region5: #{tpu_custom_call.1} parent=1 // pred_fallthru
      _
    // Predicated region
    $region6: #{tpu_custom_call.1} parent=1 // pred_check
      _
    $region7: #{tpu_custom_call.1} parent=1 // pred_check_branch
      %21 = sbr.rel (0) target = $region9
    $region8: #{tpu_custom_call.1} parent=1 // pred_region
      %s23 = ssub.s32 128, 128
      %24 = vsyncadd [#allocation6], %s23
      %s26 = sshll.u32 [#allocation5], 4
      %s27 = int_to_ptr.vmem [resolvable:$true] %s26
      %29 = dma.hbm_to_vmem [thread:$0]  %s1, 128, %s27, [#allocation6]
    $region9: #{tpu_custom_call.1} parent=1 // pred_fallthru
      _
    // Predicated region
    $region10: #{tpu_custom_call.1} parent=1 // pred_check
      _
    $region11: #{tpu_custom_call.1} parent=1 // pred_check_branch
      %31 = sbr.rel (0) target = $region13
    $region12: #{tpu_custom_call.1} parent=1 // pred_region
      %32 = dma.done [#allocation3], 128
    $region13: #{tpu_custom_call.1} parent=1 // pred_fallthru
      _
    // Predicated region
    $region14: #{tpu_custom_call.1} parent=1 // pred_check
      _
    $region15: #{tpu_custom_call.1} parent=1 // pred_check_branch
      %34 = sbr.rel (0) target = $region17
    $region16: #{tpu_custom_call.1} parent=1 // pred_region
      %35 = dma.done [#allocation6], 128
    $region17: #{tpu_custom_call.1} parent=1 // pred_fallthru
      _
    %v36 = vld [vmem:[#allocation2] sm:$0xff]
    %v37 = vld [vmem:[#allocation5] sm:$0xff]
    %v38 = vsub.f32 0.0, %v36
    %v39 = vmul.f32 %v37, 2.0
    %v40 = vsub.f32 %v39, 1.0
    %v41 = vmul.f32 %v38, %v40
    %v42 = vand.u32 2147483647, %v41
    %v43 = vsub.f32 0.0, %v42
    %v44 = vmul.f32 %v43, 1.442695
    %v45 = vpow.pop %v44
    %v46 = vmax.f32 %v36, 0.0
    %v47 = vmul.f32 %v36, %v37
    %v48 = vsub.f32 %v46, %v47
    %v49 = vand.u32 2147483647, %v36
    %v50 = vsub.f32 0.0, %v49
    %v51 = vmul.f32 %v50, 1.442695
    %v52 = vpow.pop %v51
    %v53 = vadd.f32 %v52, 1.0
    %v54 = vlog2.pop %v53
    %v55 = vmul.f32 %v54, 0.6931472
    %v56 = vmul.f32 -0.5, %v52
    %v57 = vadd.f32 %v56, 1.0
    %v58 = vmul.f32 %v57, %v52
    %v59 = vand.u32 2147483647, %v52
    %vm60 = vcmp.lt.f32.partialorder %v59, 0.0004427343
    %v61 = vsel %vm60, %v58, %v55
    %v62 = vadd.f32 %v48, %v61
    %v63 = vadd.f32 %v45, 1.0
    %v64 = vrcp.pop %v63
    %v65 = vmul.f32 %v63, %v64
    %v66 = vsub.f32 2.0, %v65
    %v67 = vmul.f32 %v64, %v66
    %vm68 = vcmp.ge.f32.partialorder %v41, 0.0
    %v69 = vsel %vm68, 1.0, %v45
    %v70 = vmul.f32 %v69, %v67
    %v71 = vmul.f32 %v70, %v70
    %v72 = vmul.f32 %v71, %v62
    %v73 = vadd.f32 %v72, 0.0
    %74 = vst [vmem:[#allocation7] sm:$0xff] %v73
    // Predicated region
    $region18: #{tpu_custom_call.1} parent=1 // pred_check
      _
    $region19: #{tpu_custom_call.1} parent=1 // pred_check_branch
      %76 = sbr.rel (0) target = $region21
    $region20: #{tpu_custom_call.1} parent=1 // pred_region
      %s78 = ssub.s32 128, 128
      %79 = vsyncadd [#allocation4], %s78
      %s81 = sshll.u32 [#allocation7], 4
      %s82 = int_to_ptr.vmem [resolvable:$true] %s81
      %84 = dma.vmem_to_hbm [thread:$0]  %s82, 128, %s2, [#allocation4]
    $region21: #{tpu_custom_call.1} parent=1 // pred_fallthru
      _
    // Predicated region
    $region22: #{tpu_custom_call.1} parent=1 // pred_check
      _
    $region23: #{tpu_custom_call.1} parent=1 // pred_check_branch
      %86 = sbr.rel (0) target = $region25
    $region24: #{tpu_custom_call.1} parent=1 // pred_region
      %87 = dma.done [#allocation4], 128
    $region25: #{tpu_custom_call.1} parent=1 // pred_fallthru
      _
    %88 = vsyncpa [#allocation3], 1
    %89 = vsyncpa [#allocation6], 1
    %90 = vsyncpa [#allocation4], 1

</llo_original>
